<compile_context>
chip_gen: v5e
topology: v5e:2x2
jax: 0.10.0
libtpu: 0.0.40
codegen_flags: <defaults>
</compile_context>

<pallas_src>
import functools
import math

import jax
import jax.numpy as jnp
from jax.experimental import pallas as pl
from jax.experimental.pallas import tpu as pltpu

_INV_SQRT2 = 1.0 / math.sqrt(2.0)


def _gelu_exact(x):
    # nn.GELU() default is the exact (erf-based) GELU.
    return 0.5 * x * (1.0 + jax.lax.erf(x * _INV_SQRT2))


def _mlp_kernel(x_ref, w1_ref, b1_ref, w2_ref, b2_ref, o_ref, *scratch, approx_gelu):
    # Grid = (M tiles ["parallel"], H tiles ["arbitrary", reduction-last]).
    #   x_ref  : (tm, C)  activation row tile (same block for every k step)
    #   w1_ref : (C, th)  k-th column slice of the fc weight   (in, out)
    #   b1_ref : (1, th)  matching fc bias slice
    #   w2_ref : (th, C)  k-th row slice of the proj weight    (in, out)
    #   b2_ref : (1, C)   proj bias (added once, in finalize)
    #   o_ref  : (tm, C)  output row tile (resident across k)
    #   scratch: optional (tm, C) f32 accumulator (only when o_ref is not f32)
    acc_ref = scratch[0] if scratch else o_ref      # f32 output -> accumulate in place
    k = pl.program_id(1)

    @pl.when(k == 0)
    def _():
        acc_ref[...] = jnp.zeros_like(acc_ref)

    h = jnp.dot(x_ref[...], w1_ref[...], preferred_element_type=jnp.float32)
    h = h + b1_ref[...].astype(jnp.float32)
    if approx_gelu:
        # tanh-approx GELU: transcendental goes to the EUP slot (co-issues with MXU).
        h = jax.nn.gelu(h, approximate=True)
    else:
        # exact erf GELU: matches nn.GELU() default semantics.
        h = _gelu_exact(h)
    acc_ref[...] += jnp.dot(h.astype(w2_ref.dtype), w2_ref[...],
                            preferred_element_type=jnp.float32)

    @pl.when(k == pl.num_programs(1) - 1)
    def _():
        # dropout: eval-mode identity
        o_ref[...] = (acc_ref[...] + b2_ref[...].astype(jnp.float32)).astype(o_ref.dtype)


def _round_up(x, m):
    return (x + m - 1) // m * m


def _vmem_budget_bytes():
    """Generation-aware VMEM budget: v7x (64 MiB phys) -> ~48 MiB, v5e/v6e (128) -> ~100."""
    try:
        cap = pltpu.get_tpu_info().vmem_capacity_bytes
    except Exception:  # conservative fallback
        cap = 64 * 1024 * 1024
    return int(max(32 * 1024 * 1024, min(cap - 16 * 1024 * 1024, 100 * 1024 * 1024)))


def _pick_block_h(H, C, tm, w_itemsize, x_itemsize, o_itemsize, budget):
    """Largest hidden tile (divisor of H, 128-multiple) whose weight slices fit the budget."""
    # Resident bytes independent of th: double-buffered x / out tiles, f32 acc (worst case), b2.
    fixed = 2 * tm * C * x_itemsize + 2 * tm * C * o_itemsize + tm * C * 4 + 2 * C * 4
    usable = int(budget * 0.85)

    def fits(th):
        per_k = 2 * (C * th + th * C + th) * w_itemsize   # double-buffered w1, w2, b1 slices
        return fixed + per_k <= usable

    for cand in (1024, 512, 256, 128):
        if cand <= H and H % cand == 0 and fits(cand):
            return cand
    if H < 128 or fits(H):
        return H
    # last resort: largest 128-multiple divisor of H that fits
    best, d = 0, 128
    while d < H:
        if H % d == 0 and fits(d):
            best = d
        d += 128
    return best if best else min(H, 128)


@functools.partial(jax.jit,
                   static_argnames=("block_m", "block_h", "compute_dtype", "approx_gelu"))
def mlp_forward(x, w1, b1, w2, b2, *, block_m=None, block_h=None,
                compute_dtype=jnp.bfloat16, approx_gelu=False):
    """x: [B, T, C] -> [B, T, C].  Fused MLP: gelu(x@w1+b1)@w2+b2 (dropout = identity)."""
    B, T, C = x.shape
    H = w1.shape[1]
    M = B * T
    out_dtype = x.dtype

    budget = _vmem_budget_bytes()

    # MXU-native compute: cast activations/weights (not biases) to bf16 unless disabled.
    cd = x.dtype if compute_dtype is None else jnp.dtype(compute_dtype)
    x2d = x.reshape(M, C).astype(cd)
    w1c = w1.astype(cd)
    w2c = w2.astype(cd)
    o_itemsize = jnp.dtype(out_dtype).itemsize

    # ---- row tile (arithmetic-intensity lever) --------------------------------
    if block_m is None:
        block_m = 768 if budget >= 96 * 1024 * 1024 else 512    # v5e/v6e vs v7x
    tm = _round_up(min(block_m, _round_up(M, 8)), 8)
    # Megacore guard (v7x: 2 TCs share the "parallel" M axis): keep >= 2 row tiles
    # when each half would still be a healthy (>=256-row) tile.
    if M >= 512 and pl.cdiv(M, tm) < 2:
        tm = _round_up(pl.cdiv(M, 2), 8)
    # Shrink tm if resident tiles alone (plus a minimal weight slice) would blow VMEM.
    while tm > 8 and (2 * tm * C * x2d.dtype.itemsize + 2 * tm * C * o_itemsize
                      + tm * C * 4
                      + 4 * C * 128 * w1c.dtype.itemsize) > int(budget * 0.85):
        tm = _round_up(tm // 2, 8)

    # ---- hidden tile -----------------------------------------------------------
    if block_h is None:
        th = _pick_block_h(H, C, tm, w1c.dtype.itemsize,
                           x2d.dtype.itemsize, o_itemsize, budget)
    else:
        th = block_h if (block_h <= H and H % block_h == 0) else H

    grid = (pl.cdiv(M, tm), H // th)
    n_m_tiles = pl.cdiv(M, tm)

    # f32 outputs accumulate directly in o_ref; other dtypes need the f32 scratch.
    use_scratch = jnp.dtype(out_dtype) != jnp.dtype(jnp.float32)
    scratch = [pltpu.VMEM((tm, C), jnp.float32)] if use_scratch else []

    # Weights are re-streamed once per M tile.
    w_bytes = (w1c.size * w1c.dtype.itemsize + w2c.size * w2c.dtype.itemsize
               + b1.size * b1.dtype.itemsize)
    bytes_accessed = (x2d.size * x2d.dtype.itemsize
                      + n_m_tiles * w_bytes
                      + b2.size * b2.dtype.itemsize
                      + M * C * o_itemsize)
    cost = pl.CostEstimate(flops=4 * M * C * H,
                           transcendentals=M * H,
                           bytes_accessed=bytes_accessed)

    kernel = functools.partial(_mlp_kernel, approx_gelu=approx_gelu)

    out2d = pl.pallas_call(
        kernel,
        out_shape=jax.ShapeDtypeStruct((M, C), out_dtype),
        grid_spec=pltpu.PrefetchScalarGridSpec(
            num_scalar_prefetch=0,
            grid=grid,
            in_specs=[
                pl.BlockSpec((tm, C), lambda i, k: (i, 0)),   # x row tile
                pl.BlockSpec((C, th), lambda i, k: (0, k)),   # w1 column slice
                pl.BlockSpec((1, th), lambda i, k: (0, k)),   # b1 slice
                pl.BlockSpec((th, C), lambda i, k: (k, 0)),   # w2 row slice
                pl.BlockSpec((1, C), lambda i, k: (0, 0)),    # b2 (whole, tiny)
            ],
            out_specs=pl.BlockSpec((tm, C), lambda i, k: (i, 0)),
            scratch_shapes=scratch,
        ),
        compiler_params=pltpu.CompilerParams(
            dimension_semantics=("parallel", "arbitrary"),
            vmem_limit_bytes=budget,
        ),
        cost_estimate=cost,
    )(x2d, w1c, b1, w2c, b2)

    return out2d.reshape(B, T, C)


def init_mlp_params(key, n_embd, dtype=jnp.float32):
    """Deterministic PyTorch-like init: U(-1/sqrt(fan_in), 1/sqrt(fan_in))."""
    hidden = 4 * n_embd
    k1, k2, k3, k4 = jax.random.split(key, 4)
    bound1 = 1.0 / math.sqrt(n_embd)
    bound2 = 1.0 / math.sqrt(hidden)
    # stored as [in, out] (transposed vs. torch's [out, in])
    w1 = jax.random.uniform(k1, (n_embd, hidden), dtype, -bound1, bound1)
    b1 = jax.random.uniform(k2, (1, hidden), dtype, -bound1, bound1)
    w2 = jax.random.uniform(k3, (hidden, n_embd), dtype, -bound2, bound2)
    b2 = jax.random.uniform(k4, (1, n_embd), dtype, -bound2, bound2)
    return w1, b1, w2, b2


if __name__ == "__main__":
    key = jax.random.PRNGKey(0)
    kx, kp = jax.random.split(key)

    # Small shapes; M=26 exercises the ragged (partial) last row tile, H=256 the H loop.
    B, T, n_embd = 2, 13, 64
    x = jax.random.normal(kx, (B, T, n_embd), jnp.float32)
    w1, b1, w2, b2 = init_mlp_params(kp, n_embd)

    # Pure-JAX reference (same math, no kernel).
    ref = _gelu_exact(x.reshape(-1, n_embd) @ w1 + b1) @ w2 + b2
    ref = ref.reshape(B, T, n_embd)

    # 1) Exact f32 path, small explicit tiles: 2 row tiles (one ragged) x 2 H-steps,
    #    direct accumulation into the f32 output block.
    out_f32 = jax.block_until_ready(
        mlp_forward(x, w1, b1, w2, b2, block_m=16, block_h=128,
                    compute_dtype=jnp.float32, approx_gelu=False))
    assert out_f32.shape == (B, T, n_embd)
    assert jnp.allclose(out_f32, ref, atol=1e-4, rtol=1e-4)

    # 2) Production defaults: bf16 MXU matmuls + tanh-approx GELU, auto tile sizes.
    out_bf16c = jax.block_until_ready(
        mlp_forward(x, w1, b1, w2, b2, approx_gelu=True))
    assert out_bf16c.shape == (B, T, n_embd)
    assert out_bf16c.dtype == x.dtype
    assert jnp.allclose(out_bf16c, ref, atol=5e-2, rtol=5e-2)

    # 3) bf16 activations end-to-end (exercises the f32 scratch-accumulator path).
    out_bf16a = jax.block_until_ready(
        mlp_forward(x.astype(jnp.bfloat16), w1, b1, w2, b2))
    assert out_bf16a.dtype == jnp.bfloat16
    assert jnp.allclose(out_bf16a.astype(jnp.float32), ref, atol=6e-2, rtol=6e-2)

    print("KERNEL_OK")
</pallas_src>

<mosaic_0001>
module attributes {stable_mosaic.version = 11 : i64} {
  func.func @_mlp_kernel(%arg0: i32, %arg1: i32, %arg2: memref<16x64xf32, #tpu.memory_space<vmem>>, %arg3: memref<64x128xf32, #tpu.memory_space<vmem>>, %arg4: memref<1x128xf32, #tpu.memory_space<vmem>>, %arg5: memref<128x64xf32, #tpu.memory_space<vmem>>, %arg6: memref<1x64xf32, #tpu.memory_space<vmem>>, %arg7: memref<16x64xf32, #tpu.memory_space<vmem>>) attributes {dimension_semantics = [#tpu.dimension_semantics<parallel>, #tpu.dimension_semantics<arbitrary>], iteration_bounds = array<i64: 2, 2>, scalar_prefetch = 0 : i64, scratch_operands = 0 : i64, tpu.core_type = #tpu.core_type<tc>, window_params = [{transform_indices = @transform_0, window_bounds = array<i64: 16, 64>}, {transform_indices = @transform_1, window_bounds = array<i64: 64, 128>}, {transform_indices = @transform_2, window_bounds = array<i64: 1, 128>}, {transform_indices = @transform_3, window_bounds = array<i64: 128, 64>}, {pipeline_mode = #tpu.pipeline_mode<synchronous>, transform_indices = @transform_4, window_bounds = array<i64: 1, 64>}, {transform_indices = @transform_5, window_bounds = array<i64: 16, 64>}]} {
    %c0_i32 = arith.constant 0 : i32
    %0 = arith.cmpi eq, %arg1, %c0_i32 : i32
    %1 = arith.extui %0 : i1 to i32
    %c0_i32_0 = arith.constant 0 : i32
    %2 = arith.cmpi ne, %1, %c0_i32_0 : i32
    scf.if %2 {
      %cst_17 = arith.constant 0.000000e+00 : f32
      %25 = vector.broadcast %cst_17 : f32 to vector<16x64xf32>
      %c0_18 = arith.constant 0 : index
      %c0_19 = arith.constant 0 : index
      %26 = vector.load %arg7[%c0_18, %c0_19] : memref<16x64xf32, #tpu.memory_space<vmem>>, vector<16x64xf32>
      tpu.vector_store %arg7[%c0_18, %c0_19], %25 {strides = array<i32>} : memref<16x64xf32, #tpu.memory_space<vmem>>, vector<16x64xf32>,
    } else {
    }
    %c0 = arith.constant 0 : index
    %c0_1 = arith.constant 0 : index
    %3 = vector.load %arg2[%c0, %c0_1] : memref<16x64xf32, #tpu.memory_space<vmem>>, vector<16x64xf32>
    %c0_2 = arith.constant 0 : index
    %c0_3 = arith.constant 0 : index
    %4 = vector.load %arg3[%c0_2, %c0_3] : memref<64x128xf32, #tpu.memory_space<vmem>>, vector<64x128xf32>
    %cst = arith.constant dense<0.000000e+00> : vector<16x128xf32>
    %5 = tpu.matmul %3, %4, %cst {dimension_numbers = #tpu.dot_dimension_numbers<[1], [0], [0], [1], [0, 0, 1, 1], [], []>} : vector<16x64xf32>, vector<64x128xf32>, vector<16x128xf32> -> vector<16x128xf32>
    %c0_4 = arith.constant 0 : index
    %c0_5 = arith.constant 0 : index
    %6 = vector.load %arg4[%c0_4, %c0_5] : memref<1x128xf32, #tpu.memory_space<vmem>>, vector<1x128xf32>
    %7 = vector.broadcast %6 : vector<1x128xf32> to vector<16x128xf32>
    %8 = arith.addf %5, %7 : vector<16x128xf32>
    %cst_6 = arith.constant 5.000000e-01 : f32
    %9 = vector.broadcast %cst_6 : f32 to vector<16x128xf32>
    %10 = arith.mulf %9, %8 : vector<16x128xf32>
    %cst_7 = arith.constant 0.707106769 : f32
    %11 = vector.broadcast %cst_7 : f32 to vector<16x128xf32>
    %12 = arith.mulf %8, %11 : vector<16x128xf32>
    %13 = math.erf %12 : vector<16x128xf32>
    %cst_8 = arith.constant 1.000000e+00 : f32
    %14 = vector.broadcast %cst_8 : f32 to vector<16x128xf32>
    %15 = arith.addf %14, %13 : vector<16x128xf32>
    %16 = arith.mulf %10, %15 : vector<16x128xf32>
    %c0_9 = arith.constant 0 : index
    %c0_10 = arith.constant 0 : index
    %17 = vector.load %arg7[%c0_9, %c0_10] : memref<16x64xf32, #tpu.memory_space<vmem>>, vector<16x64xf32>
    %c0_11 = arith.constant 0 : index
    %c0_12 = arith.constant 0 : index
    %18 = vector.load %arg5[%c0_11, %c0_12] : memref<128x64xf32, #tpu.memory_space<vmem>>, vector<128x64xf32>
    %cst_13 = arith.constant dense<0.000000e+00> : vector<16x64xf32>
    %19 = tpu.matmul %16, %18, %cst_13 {dimension_numbers = #tpu.dot_dimension_numbers<[1], [0], [0], [1], [0, 0, 1, 1], [], []>} : vector<16x128xf32>, vector<128x64xf32>, vector<16x64xf32> -> vector<16x64xf32>
    %20 = arith.addf %17, %19 : vector<16x64xf32>
    %c0_14 = arith.constant 0 : index
    %c0_15 = arith.constant 0 : index
    %21 = vector.load %arg7[%c0_14, %c0_15] : memref<16x64xf32, #tpu.memory_space<vmem>>, vector<16x64xf32>
    tpu.vector_store %arg7[%c0_14, %c0_15], %20 {strides = array<i32>} : memref<16x64xf32, #tpu.memory_space<vmem>>, vector<16x64xf32>,
    %c1_i32 = arith.constant 1 : i32
    %22 = arith.cmpi eq, %arg1, %c1_i32 : i32
    %23 = arith.extui %22 : i1 to i32
    %c0_i32_16 = arith.constant 0 : i32
    %24 = arith.cmpi ne, %23, %c0_i32_16 : i32
    scf.if %24 {
      %c0_17 = arith.constant 0 : index
      %c0_18 = arith.constant 0 : index
      %25 = vector.load %arg7[%c0_17, %c0_18] : memref<16x64xf32, #tpu.memory_space<vmem>>, vector<16x64xf32>
      %c0_19 = arith.constant 0 : index
      %c0_20 = arith.constant 0 : index
      %26 = vector.load %arg6[%c0_19, %c0_20] : memref<1x64xf32, #tpu.memory_space<vmem>>, vector<1x64xf32>
      %27 = vector.broadcast %26 : vector<1x64xf32> to vector<16x64xf32>
      %28 = arith.addf %25, %27 : vector<16x64xf32>
      %c0_21 = arith.constant 0 : index
      %c0_22 = arith.constant 0 : index
      %29 = vector.load %arg7[%c0_21, %c0_22] : memref<16x64xf32, #tpu.memory_space<vmem>>, vector<16x64xf32>
      tpu.vector_store %arg7[%c0_21, %c0_22], %28 {strides = array<i32>} : memref<16x64xf32, #tpu.memory_space<vmem>>, vector<16x64xf32>,
    } else {
    }
    return
  }
  func.func @transform_0(%arg0: i32, %arg1: i32) -> (i32, i32) {
    %c0_i32 = arith.constant 0 : i32
    %c0_i32_0 = arith.constant 0 : i32
    return %arg0, %c0_i32 : i32, i32
  }
  func.func @transform_1(%arg0: i32, %arg1: i32) -> (i32, i32) {
    %c0_i32 = arith.constant 0 : i32
    %c0_i32_0 = arith.constant 0 : i32
    return %c0_i32, %arg1 : i32, i32
  }
  func.func @transform_2(%arg0: i32, %arg1: i32) -> (i32, i32) {
    %c0_i32 = arith.constant 0 : i32
    %c0_i32_0 = arith.constant 0 : i32
    return %c0_i32, %arg1 : i32, i32
  }
  func.func @transform_3(%arg0: i32, %arg1: i32) -> (i32, i32) {
    %c0_i32 = arith.constant 0 : i32
    %c0_i32_0 = arith.constant 0 : i32
    return %arg1, %c0_i32 : i32, i32
  }
  func.func @transform_4(%arg0: i32, %arg1: i32) -> (i32, i32) {
    %c0_i32 = arith.constant 0 : i32
    %c0_i32_0 = arith.constant 0 : i32
    %c0_i32_1 = arith.constant 0 : i32
    return %c0_i32, %c0_i32_0 : i32, i32
  }
  func.func @transform_5(%arg0: i32, %arg1: i32) -> (i32, i32) {
    %c0_i32 = arith.constant 0 : i32
    %c0_i32_0 = arith.constant 0 : i32
    return %arg0, %c0_i32 : i32, i32
  }
}

</mosaic_0001>

<llo_original>
// kernel: mlp_forward.1
$region0: #{mlp_forward.1}
  #allocation0 [shape = 'u32[]', space=smem, size = 0x4, offset = 0x4, fixed_abs, tag = 'smem constant byte address 0x4 - core index']
  #allocation1 [shape = 'u32[72,128]{1,0:T(1,128)}', space=vmem, size = 0x9000, scoped, tag = 'internal scratch']
  %s0 = inlined_call_operand.vmem [shape: f32[26,64], index: 0, kind: input, shape index: {}]
  %s1 = inlined_call_operand.vmem [shape: f32[64,256], index: 1, kind: input, shape index: {}]
  %s2 = inlined_call_operand.vmem [shape: f32[1,256], index: 2, kind: input, shape index: {}]
  %s3 = inlined_call_operand.vmem [shape: f32[256,64], index: 3, kind: input, shape index: {}]
  %s4 = inlined_call_operand.vmem [shape: f32[1,64], index: 4, kind: input, shape index: {}]
  %s5 = inlined_call_operand.vmem [shape: f32[26,64], index: 5, kind: output, shape index: {}]
  %s6 = sld [smem:[#allocation0]]
  $region99: #{mlp_forward.1} parent=0
    _
  %s8 = ssub.s32 1, %s6
  %s9 = scalar_select 0, %s8, %s6
  $region1: #{mlp_forward.1} parent=0
    #allocation2 [shape = 'u8[65536]{0}', space=vmem, size = 0x10000, scoped, tag = 'input window, operand 1']
    loop: start=0, step=1, limit=6
    $region2: #{mlp_forward.1} parent=1 // loop_pre_header
      _
    $region3: #{mlp_forward.1} parent=1 // loop_header
      %s11 = sphi 0, %s15
      %p12 = scmp.ge.s32.totalorder %s11, 6
      %s18 = sphi 0, %s30
      %s19 = sphi 0, %s26
      %s20 = sphi 0, %s18
      %s21 = sphi 0, %s19
      %s22 = sphi 0, %s20
      %s23 = sphi 0, %s21
      %s33 = sphi 0, %s35
      %s36 = sphi 0, %s33
      %s37 = sphi 0, %s36
      %s53 = sphi 0, %s37
      %s59 = sphi 0, %s61
      %s62 = sphi 0, %s59
      %s63 = sphi 0, %s62
      %s79 = sphi 0, %s63
      %s85 = sphi 0, %s87
      %s88 = sphi 0, %s85
      %s89 = sphi 0, %s88
      %s105 = sphi 0, %s89
      %s111 = sphi 0, %s113
      %s114 = sphi 0, %s111
      %s115 = sphi 0, %s114
      %s131 = sphi 0, %s115
      %s135 = sphi 0, %s135
      %s137 = sphi 0, %s135
      %s138 = sphi 0, %s137
      %s152 = sphi 0, %s138
      %s158 = sphi 0, %s160
      %s161 = sphi 0, %s158
      %s162 = sphi 0, %s161
      %s178 = sphi 0, %s162
    $region4: #{mlp_forward.1} parent=1 // loop_header_branch
      %14 = sbr.rel (%p12) target = $region8
    $region5: #{mlp_forward.1} parent=1 // loop_body
      %s16 = ssub.s32 %s11, 1
      %s17 = ssub.s32 %s11, 2
      %s24 = sadd.s32 1, %s19
      %p25 = scmp.ge.s32.totalorder %s24, 2
      %s26 = scalar_select %p25, 0, %s24
      %s27 = sadd.s32 1, %s18
      %s28 = scalar_select %p25, %s27, %s18
      %p29 = scmp.ge.s32.totalorder %s28, 2
      %s30 = scalar_select %p29, 0, %s28
      %s31 = ssub.s32 %s18, %s30
      %p32 = scmp.eq.s32.totalorder %s31, 0
      %s34 = sadd.s32 %s33, 1
      %s35 = scalar_select %p32, %s33, %s34
      %p38 = pneg %p32
      %p39 = scmp.eq.s32.totalorder %s11, 3
      %p40 = por %p38, %p39
      %p41 = scmp.ne.s32.totalorder %s33, %s36
      %p42 = scmp.eq.s32.totalorder %s11, 0
      %p43 = por %p41, %p42
      %p44 = scmp.ne.s32.totalorder %s33, %s36
      %p45 = scmp.eq.s32.totalorder %s16, 3
      %p46 = por %p44, %p45
      %p47 = scmp.ne.s32.totalorder %s36, %s37
      %p48 = scmp.eq.s32.totalorder %s16, 0
      %p49 = por %p47, %p48
      %p50 = scmp.ne.s32.totalorder %s36, %s37
      %p51 = scmp.eq.s32.totalorder %s17, 3
      %p52 = por %p50, %p51
      %p54 = scmp.ne.s32.totalorder %s37, %s53
      %p55 = scmp.eq.s32.totalorder %s17, 0
      %p56 = por %p54, %p55
      %s57 = ssub.s32 %s19, %s26
      %p58 = scmp.eq.s32.totalorder %s57, 0
      %s60 = sadd.s32 %s59, 1
      %s61 = scalar_select %p58, %s59, %s60
      %p64 = pneg %p58
      %p65 = scmp.eq.s32.totalorder %s11, 3
      %p66 = por %p64, %p65
      %p67 = scmp.ne.s32.totalorder %s59, %s62
      %p68 = scmp.eq.s32.totalorder %s11, 0
      %p69 = por %p67, %p68
      %p70 = scmp.ne.s32.totalorder %s59, %s62
      %p71 = scmp.eq.s32.totalorder %s16, 3
      %p72 = por %p70, %p71
      %p73 = scmp.ne.s32.totalorder %s62, %s63
      %p74 = scmp.eq.s32.totalorder %s16, 0
      %p75 = por %p73, %p74
      %p76 = scmp.ne.s32.totalorder %s62, %s63
      %p77 = scmp.eq.s32.totalorder %s17, 3
      %p78 = por %p76, %p77
      %p80 = scmp.ne.s32.totalorder %s63, %s79
      %p81 = scmp.eq.s32.totalorder %s17, 0
      %p82 = por %p80, %p81
      %s83 = ssub.s32 %s19, %s26
      %p84 = scmp.eq.s32.totalorder %s83, 0
      %s86 = sadd.s32 %s85, 1
      %s87 = scalar_select %p84, %s85, %s86
      %p90 = pneg %p84
      %p91 = scmp.eq.s32.totalorder %s11, 3
      %p92 = por %p90, %p91
      %p93 = scmp.ne.s32.totalorder %s85, %s88
      %p94 = scmp.eq.s32.totalorder %s11, 0
      %p95 = por %p93, %p94
      %p96 = scmp.ne.s32.totalorder %s85, %s88
      %p97 = scmp.eq.s32.totalorder %s16, 3
      %p98 = por %p96, %p97
      %p99 = scmp.ne.s32.totalorder %s88, %s89
      %p100 = scmp.eq.s32.totalorder %s16, 0
      %p101 = por %p99, %p100
      %p102 = scmp.ne.s32.totalorder %s88, %s89
      %p103 = scmp.eq.s32.totalorder %s17, 3
      %p104 = por %p102, %p103
      %p106 = scmp.ne.s32.totalorder %s89, %s105
      %p107 = scmp.eq.s32.totalorder %s17, 0
      %p108 = por %p106, %p107
      %s109 = ssub.s32 %s19, %s26
      %p110 = scmp.eq.s32.totalorder %s109, 0
      %s112 = sadd.s32 %s111, 1
      %s113 = scalar_select %p110, %s111, %s112
      %p116 = pneg %p110
      %p117 = scmp.eq.s32.totalorder %s11, 3
      %p118 = por %p116, %p117
      %p119 = scmp.ne.s32.totalorder %s111, %s114
      %p120 = scmp.eq.s32.totalorder %s11, 0
      %p121 = por %p119, %p120
      %p122 = scmp.ne.s32.totalorder %s111, %s114
      %p123 = scmp.eq.s32.totalorder %s16, 3
      %p124 = por %p122, %p123
      %p125 = scmp.ne.s32.totalorder %s114, %s115
      %p126 = scmp.eq.s32.totalorder %s16, 0
      %p127 = por %p125, %p126
      %p128 = scmp.ne.s32.totalorder %s114, %s115
      %p129 = scmp.eq.s32.totalorder %s17, 3
      %p130 = por %p128, %p129
      %p132 = scmp.ne.s32.totalorder %s115, %s131
      %p133 = scmp.eq.s32.totalorder %s17, 0
      %p134 = por %p132, %p133
      %s136 = sadd.s32 %s135, 1
      %p139 = scmp.eq.s32.totalorder %s11, 3
      %p140 = scmp.ne.s32.totalorder %s135, %s137
      %p141 = scmp.eq.s32.totalorder %s11, 0
      %p142 = por %p140, %p141
      %p143 = scmp.ne.s32.totalorder %s135, %s137
      %p144 = scmp.eq.s32.totalorder %s16, 3
      %p145 = por %p143, %p144
      %p146 = scmp.ne.s32.totalorder %s137, %s138
      %p147 = scmp.eq.s32.totalorder %s16, 0
      %p148 = por %p146, %p147
      %p149 = scmp.ne.s32.totalorder %s137, %s138
      %p150 = scmp.eq.s32.totalorder %s17, 3
      %p151 = por %p149, %p150
      %p153 = scmp.ne.s32.totalorder %s138, %s152
      %p154 = scmp.eq.s32.totalorder %s17, 0
      %p155 = por %p153, %p154
      %s156 = ssub.s32 %s18, %s30
      %p157 = scmp.eq.s32.totalorder %s156, 0
      %s159 = sadd.s32 %s158, 1
      %s160 = scalar_select %p157, %s158, %s159
      %p163 = pneg %p157
      %p164 = scmp.eq.s32.totalorder %s11, 3
      %p165 = por %p163, %p164
      %p166 = scmp.ne.s32.totalorder %s158, %s161
      %p167 = scmp.eq.s32.totalorder %s11, 0
      %p168 = por %p166, %p167
      %p169 = scmp.ne.s32.totalorder %s158, %s161
      %p170 = scmp.eq.s32.totalorder %s16, 3
      %p171 = por %p169, %p170
      %p172 = scmp.ne.s32.totalorder %s161, %s162
      %p173 = scmp.eq.s32.totalorder %s16, 0
      %p174 = por %p172, %p173
      %p175 = scmp.ne.s32.totalorder %s161, %s162
      %p176 = scmp.eq.s32.totalorder %s17, 3
      %p177 = por %p175, %p176
      %p179 = scmp.ne.s32.totalorder %s162, %s178
      %p180 = scmp.eq.s32.totalorder %s17, 0
      %p181 = por %p179, %p180
      %p182 = scmp.le.s32.totalorder 1, %s11
      %p183 = scmp.lt.s32.totalorder %s11, 5
      %p184 = pnand %p182, %p183
      %p185 = pneg %p184
      // Predicated region
      $region9: #{mlp_forward.1} parent=5 // pred_check
        _
      $region10: #{mlp_forward.1} parent=5 // pred_check_branch
        %187 = sbr.rel (%p184) target = $region12
      $region11: #{mlp_forward.1} parent=5 // pred_region
        %s188 = ssub.s32 %s11, 1
        // Predicated region
        $region13: #{mlp_forward.1} parent=11 // pred_check
          %p189 = pneg %p148
        $region14: #{mlp_forward.1} parent=11 // pred_check_branch
          %191 = sbr.rel (%p189) target = $region16
        $region15: #{mlp_forward.1} parent=11 // pred_region
          _
        $region16: #{mlp_forward.1} parent=11 // pred_fallthru
          _
      $region12: #{mlp_forward.1} parent=5 // pred_fallthru
        _
      %p192 = scmp.lt.s32.totalorder %s11, 4
      // Predicated region
      $region17: #{mlp_forward.1} parent=5 // pred_check
        %p193 = pneg %p192
      $region18: #{mlp_forward.1} parent=5 // pred_check_branch
        %195 = sbr.rel (%p193) target = $region20
      $region19: #{mlp_forward.1} parent=5 // pred_region
        // Predicated region
        $region21: #{mlp_forward.1} parent=19 // pred_check
          %p196 = pneg %p43
        $region22: #{mlp_forward.1} parent=19 // pred_check_branch
          %198 = sbr.rel (%p196) target = $region24
        $region23: #{mlp_forward.1} parent=19 // pred_region
          %s199 = smul.u32 2, %s18
          %p200 = scmp.lt.s32.totalorder %s199, 3
          %s201 = scalar_select %p200, %s199, 3
          %s202 = smul.addr %s201, 8
          %s203 = scalar_lea.vmem %s0, %s202
          %s204 = smul.u32 2, %s18
        $region24: #{mlp_forward.1} parent=19 // pred_fallthru
          _
        // Predicated region
        $region25: #{mlp_forward.1} parent=19 // pred_check
          %p205 = pneg %p69
        $region26: #{mlp_forward.1} parent=19 // pred_check_branch
          %207 = sbr.rel (%p205) target = $region28
        $region27: #{mlp_forward.1} parent=19 // pred_region
          %s208 = sand.u32 %s59, 1
          %s209 = sand.u32 %s59, 1
          %s210 = smul.addr %s209, 64
          %s211 = scalar_lea.vmem [#allocation2], %s210
          %s212 = smul.addr %s19, 8
          %s213 = scalar_lea.vmem %s1, %s212
          // Predicated region
          $region29: #{mlp_forward.1} parent=27 // pred_check
            _
          $region30: #{mlp_forward.1} parent=27 // pred_check_branch
            %215 = sbr.rel (0) target = $region32
          $region31: #{mlp_forward.1} parent=27 // pred_region
            // Predicated region
            $region33: #{mlp_forward.1} parent=31 // pred_check
              _
            $region34: #{mlp_forward.1} parent=31 // pred_check_branch
              %217 = sbr.rel (0) target = $region36
            $region35: #{mlp_forward.1} parent=31 // pred_region
              // Predicated region
              $region48: #{mlp_forward.1} parent=35 // pred_check
                _
              $region49: #{mlp_forward.1} parent=35 // pred_check_branch
                %247 = sbr.rel (0) target = $region51
              $region50: #{mlp_forward.1} parent=35 // pred_region
                loop: start=0, step=1, limit=1
                $region52: #{mlp_forward.1} parent=50 // loop_pre_header
                  _
                $region53: #{mlp_forward.1} parent=50 // loop_header
                  %s249 = sphi 0, %s253
                  %p250 = scmp.ge.s32.totalorder %s249, 1
                  %s254 = sphi %s213, %s213
                  %s255 = sphi %s211, %s211
                $region54: #{mlp_forward.1} parent=50 // loop_header_branch
                  %252 = sbr.rel (%p250) target = $region58
                $region55: #{mlp_forward.1} parent=50 // loop_body
                  %v256 = vld [vmem:[%s254] sm:$0xff]
                  %257 = vst [vmem:[%s255] sm:$0xff] %v256
                  %v258 = vld [vmem:[%s254 + $0x10] sm:$0xff]
                  %259 = vst [vmem:[%s255 + $0x8] sm:$0xff] %v258
                  %v260 = vld [vmem:[%s254 + $0x20] sm:$0xff]
                  %261 = vst [vmem:[%s255 + $0x10] sm:$0xff] %v260
                  %v262 = vld [vmem:[%s254 + $0x30] sm:$0xff]
                  %263 = vst [vmem:[%s255 + $0x18] sm:$0xff] %v262
                  %v264 = vld [vmem:[%s254 + $0x40] sm:$0xff]
                  %265 = vst [vmem:[%s255 + $0x20] sm:$0xff] %v264
                  %v266 = vld [vmem:[%s254 + $0x50] sm:$0xff]
                  %267 = vst [vmem:[%s255 + $0x28] sm:$0xff] %v266
                  %v268 = vld [vmem:[%s254 + $0x60] sm:$0xff]
                  %269 = vst [vmem:[%s255 + $0x30] sm:$0xff] %v268
                  %v270 = vld [vmem:[%s254 + $0x70] sm:$0xff]
                  %271 = vst [vmem:[%s255 + $0x38] sm:$0xff] %v270
                $region56: #{mlp_forward.1} parent=50 // loop_footer
                  %s253 = sadd.s32 1, %s249
                $region57: #{mlp_forward.1} parent=50 // loop_footer_branch
                  %248 = sbr.rel target = $region53
                $region58: #{mlp_forward.1} parent=50 // loop_exit
                  _
              $region51: #{mlp_forward.1} parent=35 // pred_fallthru
                _
              // Predicated region
              $region59: #{mlp_forward.1} parent=35 // pred_check
                _
              $region60: #{mlp_forward.1} parent=35 // pred_check_branch
                %273 = sbr.rel target = $region62
              $region61: #{mlp_forward.1} parent=35 // pred_region
                _
              $region62: #{mlp_forward.1} parent=35 // pred_fallthru
                _
            $region36: #{mlp_forward.1} parent=31 // pred_fallthru
              _
            // Predicated region
            $region37: #{mlp_forward.1} parent=31 // pred_check
              _
            $region38: #{mlp_forward.1} parent=31 // pred_check_branch
              %219 = sbr.rel target = $region40
            $region39: #{mlp_forward.1} parent=31 // pred_region
              %s221 = ssub.s32 256, 1
              loop: start=0, step=1, limit=1
              $region41: #{mlp_forward.1} parent=39 // loop_pre_header
                _
              $region42: #{mlp_forward.1} parent=39 // loop_header
                %s223 = sphi 0, %s227
                %p224 = scmp.ge.s32.totalorder %s223, 1
                %s228 = sphi %s213, %s213
                %s229 = sphi %s211, %s211
              $region43: #{mlp_forward.1} parent=39 // loop_header_branch
                %226 = sbr.rel (%p224) target = $region47
              $region44: #{mlp_forward.1} parent=39 // loop_body
                %v230 = vld [vmem:[%s228] sm:%s221]
                %231 = vst [vmem:[%s229] sm:%s221] %v230
                %v232 = vld [vmem:[%s228 + $0x10] sm:%s221]
                %233 = vst [vmem:[%s229 + $0x8] sm:%s221] %v232
                %v234 = vld [vmem:[%s228 + $0x20] sm:%s221]
                %235 = vst [vmem:[%s229 + $0x10] sm:%s221] %v234
                %v236 = vld [vmem:[%s228 + $0x30] sm:%s221]
                %237 = vst [vmem:[%s229 + $0x18] sm:%s221] %v236
                %v238 = vld [vmem:[%s228 + $0x40] sm:%s221]
                %239 = vst [vmem:[%s229 + $0x20] sm:%s221] %v238
                %v240 = vld [vmem:[%s228 + $0x50] sm:%s221]
                %241 = vst [vmem:[%s229 + $0x28] sm:%s221] %v240
                %v242 = vld [vmem:[%s228 + $0x60] sm:%s221]
                %243 = vst [vmem:[%s229 + $0x30] sm:%s221] %v242
                %v244 = vld [vmem:[%s228 + $0x70] sm:%s221]
                %245 = vst [vmem:[%s229 + $0x38] sm:%s221] %v244
              $region45: #{mlp_forward.1} parent=39 // loop_footer
                %s227 = sadd.s32 1, %s223
              $region46: #{mlp_forward.1} parent=39 // loop_footer_branch
                %222 = sbr.rel target = $region42
              $region47: #{mlp_forward.1} parent=39 // loop_exit
                _
            $region40: #{mlp_forward.1} parent=31 // pred_fallthru
              _
          $region32: #{mlp_forward.1} parent=27 // pred_fallthru
            _
          %274 = vnop
        $region28: #{mlp_forward.1} parent=19 // pred_fallthru
          _
        // Predicated region
        $region63: #{mlp_forward.1} parent=19 // pred_check
          %p275 = pneg %p95
        $region64: #{mlp_forward.1} parent=19 // pred_check_branch
          %277 = sbr.rel (%p275) target = $region66
        $region65: #{mlp_forward.1} parent=19 // pred_region
          %p278 = scmp.lt.s32.totalorder %s19, 1
          %s279 = scalar_select %p278, %s19, 1
          %s280 = scalar_lea.vmem %s2, %s279
        $region66: #{mlp_forward.1} parent=19 // pred_fallthru
          _
        // Predicated region
        $region67: #{mlp_forward.1} parent=19 // pred_check
          %p281 = pneg %p121
        $region68: #{mlp_forward.1} parent=19 // pred_check_branch
          %283 = sbr.rel (%p281) target = $region70
        $region69: #{mlp_forward.1} parent=19 // pred_region
          %s284 = smul.u32 16, %s19
          %p285 = scmp.lt.s32.totalorder %s284, 31
          %s286 = scalar_select %p285, %s284, 31
          %s287 = smul.addr %s286, 8
          %s288 = scalar_lea.vmem %s3, %s287
          %s289 = smul.u32 16, %s19
        $region70: #{mlp_forward.1} parent=19 // pred_fallthru
          _
      $region20: #{mlp_forward.1} parent=5 // pred_fallthru
        _
      %p290 = scmp.le.s32.totalorder 1, %s11
      %p291 = scmp.lt.s32.totalorder %s11, 5
      %p292 = pnand %p290, %p291
      %p293 = pneg %p292
      // Predicated region
      $region71: #{mlp_forward.1} parent=5 // pred_check
        _
      $region72: #{mlp_forward.1} parent=5 // pred_check_branch
        %295 = sbr.rel (%p292) target = $region74
      $region73: #{mlp_forward.1} parent=5 // pred_region
        %s296 = ssub.s32 %s11, 1
        %s297 = sand.u32 %s62, 1
        %s298 = sand.u32 %s62, 1
        %s299 = smul.addr %s298, 64
        %s300 = scalar_lea.vmem [#allocation2], %s299
        // Predicated region
        $region75: #{mlp_forward.1} parent=73 // pred_check
          %p301 = pneg %p75
        $region76: #{mlp_forward.1} parent=73 // pred_check_branch
          %303 = sbr.rel (%p301) target = $region78
        $region77: #{mlp_forward.1} parent=73 // pred_region
          _
        $region78: #{mlp_forward.1} parent=73 // pred_fallthru
          _
        %s304 = smul.u32 2, %s20
        %p305 = scmp.lt.s32.totalorder %s304, 3
        %s306 = scalar_select %p305, %s304, 3
        %s307 = smul.addr %s306, 8
        %s308 = scalar_lea.vmem %s0, %s307
        %p309 = pneg %p49
        %p310 = pneg %p46
        %s311 = sand.u32 %s62, 1
        %s312 = sand.u32 %s62, 1
        %s313 = smul.addr %s312, 64
        %s314 = scalar_lea.vmem [#allocation2], %s313
        %p315 = pneg %p75
        %p316 = pneg %p72
        %p317 = scmp.lt.s32.totalorder %s21, 1
        %s318 = scalar_select %p317, %s21, 1
        %s319 = scalar_lea.vmem %s2, %s318
        %p320 = pneg %p101
        %p321 = pneg %p98
        %s322 = smul.u32 16, %s21
        %p323 = scmp.lt.s32.totalorder %s322, 31
        %s324 = scalar_select %p323, %s322, 31
        %s325 = smul.addr %s324, 8
        %s326 = scalar_lea.vmem %s3, %s325
        %p327 = pneg %p127
        %p328 = pneg %p124
        %p329 = pneg %p148
        %p330 = pneg %p145
        %p331 = pneg %p174
        %p332 = pneg %p171
        %s333 = smul.u32 2, %s20
        %p334 = scmp.lt.s32.totalorder %s333, 3
        %s335 = scalar_select %p334, %s333, 3
        %s336 = smul.addr %s335, 8
        %s337 = scalar_lea.vmem %s5, %s336
        %s338 = smul.u32 2, %s20
        %p339 = scmp.lt.s32.totalorder %s338, 3
        %s340 = scalar_select %p339, %s338, 3
        %s341 = smul.addr %s340, 8
        %s342 = scalar_lea.vmem %s0, %s341
        %s343 = smul.u32 2, %s20
        %p344 = scmp.lt.s32.totalorder %s21, 1
        %s345 = scalar_select %p344, %s21, 1
        %s346 = scalar_lea.vmem %s2, %s345
        %s347 = smul.u32 16, %s21
        %p348 = scmp.lt.s32.totalorder %s347, 31
        %s349 = scalar_select %p348, %s347, 31
        %s350 = smul.addr %s349, 8
        %s351 = scalar_lea.vmem %s3, %s350
        %s352 = smul.u32 16, %s21
        %s353 = smul.u32 2, %s20
        %p354 = scmp.lt.s32.totalorder %s353, 3
        %s355 = scalar_select %p354, %s353, 3
        %s356 = smul.addr %s355, 8
        %s357 = scalar_lea.vmem %s5, %s356
        %s358 = smul.u32 2, %s20
        %p359 = scmp.eq.s32.totalorder %s21, 0
        // Predicated region
        $region79: #{mlp_forward.1} parent=73 // pred_check
          %p360 = pneg %p359
        $region80: #{mlp_forward.1} parent=73 // pred_check_branch
          %362 = sbr.rel (%p360) target = $region82
        $region81: #{mlp_forward.1} parent=73 // pred_region
          %vm363 = vcmask 523264
          %364 = vst.msk [vmem:[%s357] sm:$0xff] %vm363, 0.0
          %365 = vst.msk [vmem:[%s357 + $0x8] sm:$0xff] %vm363, 0.0
        $region82: #{mlp_forward.1} parent=73 // pred_fallthru
          _
        %v366 = vld [vmem:[%s342] sm:$0xff]
        %v367 = vld [vmem:[%s342 + $0x8] sm:$0xff]
        %v368 = vld [vmem:[%s300] sm:$0xff]
        %v369 = vld [vmem:[%s300 + $0x8] sm:$0xff]
        %v370 = vld [vmem:[%s300 + $0x10] sm:$0xff]
        %v371 = vld [vmem:[%s300 + $0x18] sm:$0xff]
        %v372 = vld [vmem:[%s300 + $0x20] sm:$0xff]
        %v373 = vld [vmem:[%s300 + $0x28] sm:$0xff]
        %v374 = vld [vmem:[%s300 + $0x30] sm:$0xff]
        %v375 = vld [vmem:[%s300 + $0x38] sm:$0xff]
        %v376 = vld [vmem:[%s346] sm:$0x1]
        %v378 = vperm.slane %v376, 0
        %vm380 = vcmask 523264
        %v382 = vsel %vm380, %v366, 0
        %v385 = vsel %vm380, %v367, 0
        %387 = vmatpush.msra.mxu0 0.0
        %388 = vmatpush.msra.mxu0 0.0
        %389 = vmatpush.msra.mxu0 0.0
        %390 = vmatpush.msra.mxu0 0.0
        %391 = vmatpush.msra.mxu0 0.0
        %392 = vmatpush.msra.mxu0 0.0
        %393 = vmatpush.msra.mxu0 0.0
        %394 = vmatpush.msra.mxu0 0.0
        %395 = vmatpush.msra.mxu0 %v375
        %396 = vmatpush.msra.mxu0 %v374
        %397 = vmatpush.msra.mxu0 %v373
        %398 = vmatpush.msra.mxu0 %v372
        %399 = vmatpush.msra.mxu0 %v371
        %400 = vmatpush.msra.mxu0 %v370
        %401 = vmatpush.msra.mxu0 %v369
        %402 = vmatpush.msra.mxu0 %v368
        %403 = vmatmul.f32.gmra.mxu0 %v382
        %v404 = vpop.f32.mrf.mxu0
        %v405 = vadd.f32 %v378, %v404
        %406 = vmatmul.f32.gmra.mxu0 %v385
        %v407 = vpop.f32.mrf.mxu0
        %v408 = vadd.f32 %v378, %v407
        %409 = vdwg.mxu0
        %v410 = vmul.f32 %v405, 0.5
        %v411 = vmul.f32 %v408, 0.5
        %v412 = vmul.f32 %v405, 0.70710677
        %v413 = vmul.f32 %v408, 0.70710677
        %v414 = vmul.f32 %v412, %v412
        %v415 = vmin.f32 16.0, %v414
        %v416 = vmul.f32 %v415, 2.1237322e-06
        %v417 = vadd.f32 %v416, 0.00028619796
        %v418 = vmul.f32 %v415, %v417
        %v419 = vadd.f32 %v418, 0.0036580483
        %v420 = vmul.f32 %v415, %v419
        %v421 = vadd.f32 %v420, 0.05243302
        %v422 = vmul.f32 %v415, %v421
        %v423 = vadd.f32 %v422, 0.18741608
        %v424 = vmul.f32 %v415, %v423
        %v425 = vadd.f32 %v424, 1.1283791
        %v426 = vmul.f32 %v412, %v425
        %v427 = vmul.f32 %v415, 3.8918573e-05
        %v428 = vadd.f32 %v427, 0.001143296
        %v429 = vmul.f32 %v415, %v428
        %v430 = vadd.f32 %v429, 0.014752088
        %v431 = vmul.f32 %v415, %v430
        %v432 = vadd.f32 %v431, 0.112945676
        %v433 = vmul.f32 %v415, %v432
        %v434 = vadd.f32 %v433, 0.4994258
        %v435 = vmul.f32 %v415, %v434
        %v436 = vadd.f32 %v435, 1.0
        %v437 = vrcp.pop %v436
        %v438 = vmul.f32 %v436, %v437
        %v439 = vsub.f32 1.0, %v438
        %v440 = vmul.f32 %v437, %v439
        %v441 = vadd.f32 %v437, %v440
        %vm442 = vweird.f32 %v436
        %vm443 = vweird.f32 %v437
        %vm444 = vmor %vm442, %vm443
        %v445 = vsel %vm444, %v437, %v441
        %v446 = vand.u32 2147483647, %v436
        %vm447 = vcmp.eq.f32.partialorder %v446, 8.507059e+37
        %v448 = vand.u32 %v436, 2147483648
        %v449 = vor.u32 1.1754944e-38, %v448
        %v450 = vsel %vm447, %v449, %v445
        %v451 = vmul.f32 %v426, %v450
        %v452 = vmin.f32 %v451, 1.0
        %v453 = vmax.f32 %v452, -1.0
        %v454 = vmul.f32 %v413, %v413
        %v455 = vmin.f32 16.0, %v454
        %v456 = vmul.f32 %v455, 2.1237322e-06
        %v457 = vadd.f32 %v456, 0.00028619796
        %v458 = vmul.f32 %v455, %v457
        %v459 = vadd.f32 %v458, 0.0036580483
        %v460 = vmul.f32 %v455, %v459
        %v461 = vadd.f32 %v460, 0.05243302
        %v462 = vmul.f32 %v455, %v461
        %v463 = vadd.f32 %v462, 0.18741608
        %v464 = vmul.f32 %v455, %v463
        %v465 = vadd.f32 %v464, 1.1283791
        %v466 = vmul.f32 %v413, %v465
        %v467 = vmul.f32 %v455, 3.8918573e-05
        %v468 = vadd.f32 %v467, 0.001143296
        %v469 = vmul.f32 %v455, %v468
        %v470 = vadd.f32 %v469, 0.014752088
        %v471 = vmul.f32 %v455, %v470
        %v472 = vadd.f32 %v471, 0.112945676
        %v473 = vmul.f32 %v455, %v472
        %v474 = vadd.f32 %v473, 0.4994258
        %v475 = vmul.f32 %v455, %v474
        %v476 = vadd.f32 %v475, 1.0
        %v477 = vrcp.pop %v476
        %v478 = vmul.f32 %v476, %v477
        %v479 = vsub.f32 1.0, %v478
        %v480 = vmul.f32 %v477, %v479
        %v481 = vadd.f32 %v477, %v480
        %vm482 = vweird.f32 %v476
        %vm483 = vweird.f32 %v477
        %vm484 = vmor %vm482, %vm483
        %v485 = vsel %vm484, %v477, %v481
        %v486 = vand.u32 2147483647, %v476
        %vm487 = vcmp.eq.f32.partialorder %v486, 8.507059e+37
        %v488 = vand.u32 %v476, 2147483648
        %v489 = vor.u32 1.1754944e-38, %v488
        %v490 = vsel %vm487, %v489, %v485
        %v491 = vmul.f32 %v466, %v490
        %v492 = vmin.f32 %v491, 1.0
        %v493 = vmax.f32 %v492, -1.0
        %v494 = vadd.f32 %v453, 1.0
        %v495 = vadd.f32 %v493, 1.0
        %v496 = vmul.f32 %v410, %v494
        %v497 = vmul.f32 %v411, %v495
        %v498 = vld [vmem:[%s357] sm:$0xff]
        %v499 = vld [vmem:[%s357 + $0x8] sm:$0xff]
        %v500 = vld [vmem:[%s351] sm:$0xff]
        %v501 = vld [vmem:[%s351 + $0x8] sm:$0xff]
        %v502 = vld [vmem:[%s351 + $0x10] sm:$0xff]
        %v503 = vld [vmem:[%s351 + $0x18] sm:$0xff]
        %v504 = vld [vmem:[%s351 + $0x20] sm:$0xff]
        %v505 = vld [vmem:[%s351 + $0x28] sm:$0xff]
        %v506 = vld [vmem:[%s351 + $0x30] sm:$0xff]
        %v507 = vld [vmem:[%s351 + $0x38] sm:$0xff]
        %v508 = vld [vmem:[%s351 + $0x40] sm:$0xff]
        %v509 = vld [vmem:[%s351 + $0x48] sm:$0xff]
        %v510 = vld [vmem:[%s351 + $0x50] sm:$0xff]
        %v511 = vld [vmem:[%s351 + $0x58] sm:$0xff]
        %v512 = vld [vmem:[%s351 + $0x60] sm:$0xff]
        %v513 = vld [vmem:[%s351 + $0x68] sm:$0xff]
        %v514 = vld [vmem:[%s351 + $0x70] sm:$0xff]
        %v515 = vld [vmem:[%s351 + $0x78] sm:$0xff]
        %516 = vmatpush.msra.mxu0 %v515
        %517 = vmatpush.msra.mxu0 %v514
        %518 = vmatpush.msra.mxu0 %v513
        %519 = vmatpush.msra.mxu0 %v512
        %520 = vmatpush.msra.mxu0 %v511
        %521 = vmatpush.msra.mxu0 %v510
        %522 = vmatpush.msra.mxu0 %v509
        %523 = vmatpush.msra.mxu0 %v508
        %524 = vmatpush.msra.mxu0 %v507
        %525 = vmatpush.msra.mxu0 %v506
        %526 = vmatpush.msra.mxu0 %v505
        %527 = vmatpush.msra.mxu0 %v504
        %528 = vmatpush.msra.mxu0 %v503
        %529 = vmatpush.msra.mxu0 %v502
        %530 = vmatpush.msra.mxu0 %v501
        %531 = vmatpush.msra.mxu0 %v500
        %532 = vmatmul.f32.gmra.mxu0 %v496
        %v533 = vpop.f32.mrf.mxu0
        %v534 = vadd.f32 0.0, %v533
        %535 = vmatmul.f32.gmra.mxu0 %v497
        %v536 = vpop.f32.mrf.mxu0
        %v537 = vadd.f32 0.0, %v536
        %538 = vdwg.mxu0
        %v539 = vadd.f32 %v498, %v534
        %v540 = vadd.f32 %v499, %v537
        %541 = vst.msk [vmem:[%s357] sm:$0xff] %vm380, %v539
        %542 = vst.msk [vmem:[%s357 + $0x8] sm:$0xff] %vm380, %v540
        %p543 = scmp.eq.s32.totalorder %s21, 1
        // Predicated region
        $region83: #{mlp_forward.1} parent=73 // pred_check
          %p544 = pneg %p543
        $region84: #{mlp_forward.1} parent=73 // pred_check_branch
          %546 = sbr.rel (%p544) target = $region86
        $region85: #{mlp_forward.1} parent=73 // pred_region
          %v547 = vld [vmem:[%s357] sm:$0xff]
          %v548 = vld [vmem:[%s357 + $0x8] sm:$0xff]
          %v549 = vld [vmem:[%s4] sm:$0x1]
          %v551 = vperm.slane %v549, 0
          %v553 = vadd.f32 %v547, %v551
          %v554 = vadd.f32 %v548, %v551
          %555 = vst.msk [vmem:[%s357] sm:$0xff] %vm380, %v553
          %556 = vst.msk [vmem:[%s357 + $0x8] sm:$0xff] %vm380, %v554
        $region86: #{mlp_forward.1} parent=73 // pred_fallthru
          _
        %s557 = smul.u32 2, %s20
        %p558 = scmp.lt.s32.totalorder %s557, 3
        %s559 = scalar_select %p558, %s557, 3
        %s560 = smul.addr %s559, 8
        %s561 = scalar_lea.vmem %s5, %s560
        // Predicated region
        $region87: #{mlp_forward.1} parent=73 // pred_check
          %p562 = pneg %p171
        $region88: #{mlp_forward.1} parent=73 // pred_check_branch
          %564 = sbr.rel (%p562) target = $region90
        $region89: #{mlp_forward.1} parent=73 // pred_region
          %s565 = smul.u32 2, %s20
        $region90: #{mlp_forward.1} parent=73 // pred_fallthru
          _
      $region74: #{mlp_forward.1} parent=5 // pred_fallthru
        _
      %p566 = scmp.le.s32.totalorder 2, %s11
      // Predicated region
      $region91: #{mlp_forward.1} parent=5 // pred_check
        %p567 = pneg %p566
      $region92: #{mlp_forward.1} parent=5 // pred_check_branch
        %569 = sbr.rel (%p567) target = $region94
      $region93: #{mlp_forward.1} parent=5 // pred_region
        %s570 = ssub.s32 %s11, 2
        // Predicated region
        $region95: #{mlp_forward.1} parent=93 // pred_check
          %p571 = pneg %p177
        $region96: #{mlp_forward.1} parent=93 // pred_check_branch
          %573 = sbr.rel (%p571) target = $region98
        $region97: #{mlp_forward.1} parent=93 // pred_region
          %s574 = smul.u32 2, %s22
          %p575 = scmp.lt.s32.totalorder %s574, 3
          %s576 = scalar_select %p575, %s574, 3
          %s577 = smul.addr %s576, 8
          %s578 = scalar_lea.vmem %s5, %s577
        $region98: #{mlp_forward.1} parent=93 // pred_fallthru
          _
      $region94: #{mlp_forward.1} parent=5 // pred_fallthru
        _
    $region6: #{mlp_forward.1} parent=1 // loop_footer
      %s15 = sadd.s32 1, %s11
    $region7: #{mlp_forward.1} parent=1 // loop_footer_branch
      %10 = sbr.rel target = $region3
    $region8: #{mlp_forward.1} parent=1 // loop_exit
      _

</llo_original>
